<compile_context>
chip_gen: v7x
topology: tpu7x:2x2x1
jax: 0.10.0
libtpu: 0.0.40
codegen_flags: <defaults>
</compile_context>

<pallas_src>
import functools

import jax
import jax.numpy as jnp
from jax.experimental import pallas as pl
from jax.experimental.pallas import tpu as pltpu


# ---------------------------------------------------------------------------
# Tiling helpers
# ---------------------------------------------------------------------------
_TM_CAP = 512
_VMEM_BUDGET = 36 * 1024 * 1024        # target usage, safe on every generation
_VMEM_LIMIT_CAP = 48 * 1024 * 1024     # stays under v7x's 64 MiB/TC physical


def _round_up(x, m):
    return ((x + m - 1) // m) * m


def _shrink_128(t):
    return max(128, ((t // 2) // 128) * 128)


def _vmem_estimate(tm, tk, tn, rank, x_bytes, w_bytes, out_bytes):
    fused_rhs = 2 * tk * (rank + 1) * tn * w_bytes     # double-buffered weights
    x_buf = 2 * tm * tk * x_bytes                      # double-buffered x tile
    out_buf = 2 * tm * tn * out_bytes                  # double-buffered out tile
    acc = tm * (rank + 1) * tn * 4                     # f32 accumulator scratch
    bias_buf = 2 * 8 * tn * 4                          # (1, tn) -> 8 sublanes
    return fused_rhs + x_buf + out_buf + acc + bias_buf


def _select_kn_tiles(K, N, rank, tk_cap=512, tn_cap=512, budget=_VMEM_BUDGET):
    """Rank-aware K/N tile caps so the fused (R+1)-wide RHS fits VMEM."""
    tk = min(_round_up(K, 128), tk_cap)
    tn = min(_round_up(N, 128), tn_cap)
    while _vmem_estimate(_TM_CAP, tk, tn, rank, 2, 2, 4) > budget:
        if tn > 128:
            tn = _shrink_128(tn)
        elif tk > 128:
            tk = _shrink_128(tk)
        else:
            break
    return tk, tn


# ---------------------------------------------------------------------------
# Pallas kernel
# ---------------------------------------------------------------------------
def _convex_quadratic_kernel(x_ref, rhs_ref, b_ref, o_ref, acc_ref, *, rank, tn):
    k = pl.program_id(2)

    @pl.when(k == 0)
    def _():
        acc_ref[...] = jnp.zeros_like(acc_ref)

    # One wide bf16 MXU matmul per grid step:
    #   x (tm, tk) @ fused RHS (tk, (R+1)*tn)  ->  f32 accumulator.
    acc_ref[...] += jnp.dot(x_ref[...], rhs_ref[...],
                            preferred_element_type=jnp.float32)

    @pl.when(k == pl.num_programs(2) - 1)
    def _():
        # Slab 0 is the linear term, slabs 1..R are the rank projections.
        # Accumulate slab-by-slab (no (R, tm, tn) temporary).
        out = acc_ref[:, 0:tn] + b_ref[...]
        for r in range(rank):
            h = acc_ref[:, (r + 1) * tn:(r + 2) * tn]
            out += h * h
        o_ref[...] = out.astype(o_ref.dtype)


# ---------------------------------------------------------------------------
# One-time weight preparation (hoisted out of the forward pass)
# ---------------------------------------------------------------------------
def prepare_convex_quadratic_params(quadratic_decomposed, weight, bias=None, *,
                                    compute_dtype=jnp.bfloat16,
                                    tk_cap=512, tn_cap=512, tm_cap=_TM_CAP):
    """Transpose, pad, tile-interleave, concatenate and cast the weights once."""
    K, R, N = quadratic_decomposed.shape
    assert weight.shape == (N, K), "weight must be (out_features, in_features)"

    tk, tn = _select_kn_tiles(K, N, R, tk_cap=tk_cap, tn_cap=tn_cap)
    Kp = _round_up(K, tk)
    Np = _round_up(N, tn)

    # slab 0 = W^T, slabs 1..R = Q[:, r, :]   (all logically (K, N))
    slabs = jnp.concatenate(
        [jnp.transpose(weight, (1, 0))[None],
         jnp.transpose(quadratic_decomposed, (1, 0, 2))], axis=0)
    slabs = slabs.astype(compute_dtype)
    slabs = jnp.pad(slabs, ((0, 0), (0, Kp - K), (0, Np - N)))
    # Interleave by N-tile: fused[k, j*(R+1)*tn + s*tn + c] = slabs[s, k, j*tn + c]
    # so BlockSpec block (k, j) holds the j-th tn-wide N tile of every slab.
    fused = (slabs.reshape(R + 1, Kp, Np // tn, tn)
                  .transpose(1, 2, 0, 3)
                  .reshape(Kp, (Np // tn) * (R + 1) * tn))

    b = bias if bias is not None else jnp.zeros((N,), jnp.float32)
    b2 = jnp.pad(jnp.reshape(b.astype(jnp.float32), (1, N)),
                 ((0, 0), (0, Np - N)))

    return dict(fused_rhs=fused, bias2=b2, rank=R,
                in_features=K, out_features=N,
                tk=tk, tn=tn, tm_cap=tm_cap, Kp=Kp, Np=Np,
                compute_dtype=compute_dtype)


# ---------------------------------------------------------------------------
# Forward pass
# ---------------------------------------------------------------------------
def convex_quadratic_apply(params, x):
    K = params["in_features"]
    N = params["out_features"]
    assert x.shape[-1] == K
    lead_shape = x.shape[:-1]
    x2 = jnp.reshape(x, (-1, K))
    M = x2.shape[0]

    R, tk, tn = params["rank"], params["tk"], params["tn"]
    Kp, Np = params["Kp"], params["Np"]
    compute_dtype = params["compute_dtype"]
    out_dtype = x.dtype

    tm = min(_round_up(M, 8), params["tm_cap"])
    # v7x megacore: if the whole problem would be one (i, j) tile and the batch
    # is big enough, split M in two so both TensorCores get work.
    if _round_up(M, tm) // tm == 1 and Np // tn == 1 and M >= 256:
        tm = _round_up((M + 1) // 2, 8)
    Mp = _round_up(M, tm)

    xc = x2.astype(compute_dtype)
    if Mp != M or Kp != K:
        xc = jnp.pad(xc, ((0, Mp - M), (0, Kp - K)))

    grid = (Mp // tm, Np // tn, Kp // tk)

    est = _vmem_estimate(tm, tk, tn, R,
                         jnp.dtype(compute_dtype).itemsize,
                         jnp.dtype(compute_dtype).itemsize,
                         jnp.dtype(out_dtype).itemsize)
    vmem_limit = int(min(_VMEM_LIMIT_CAP,
                         max(32 * 1024 * 1024, int(est * 1.4) + (2 << 20))))

    kernel = functools.partial(_convex_quadratic_kernel, rank=R, tn=tn)

    out = pl.pallas_call(
        kernel,
        out_shape=jax.ShapeDtypeStruct((Mp, Np), out_dtype),
        grid_spec=pltpu.PrefetchScalarGridSpec(
            num_scalar_prefetch=0,
            grid=grid,
            in_specs=[
                pl.BlockSpec((tm, tk), lambda i, j, k: (i, k)),            # x
                pl.BlockSpec((tk, (R + 1) * tn), lambda i, j, k: (k, j)),  # fused W^T|Q
                pl.BlockSpec((1, tn), lambda i, j, k: (0, j)),             # bias
            ],
            out_specs=pl.BlockSpec((tm, tn), lambda i, j, k: (i, j)),
            scratch_shapes=[pltpu.VMEM((tm, (R + 1) * tn), jnp.float32)],
        ),
        compiler_params=pltpu.CompilerParams(
            dimension_semantics=("parallel", "parallel", "arbitrary"),
            vmem_limit_bytes=vmem_limit,
        ),
    )(xc, params["fused_rhs"], params["bias2"])

    if Mp != M or Np != N:
        out = out[:M, :N]
    return jnp.reshape(out, lead_shape + (N,))


def convex_quadratic_forward(x, quadratic_decomposed, weight, bias=None, *,
                             compute_dtype=jnp.bfloat16):
    """Convenience one-shot wrapper (the module hoists `prepare` to init)."""
    params = prepare_convex_quadratic_params(
        quadratic_decomposed, weight, bias, compute_dtype=compute_dtype)
    return convex_quadratic_apply(params, x)


# ---------------------------------------------------------------------------
# Module equivalent
# ---------------------------------------------------------------------------
class ConvexQuadratic:
    """JAX/Pallas equivalent of the PyTorch ConvexQuadratic layer."""

    def __init__(self, in_features, out_features, bias=True, rank=1, *,
                 key, dtype=jnp.float32, compute_dtype=jnp.bfloat16,
                 tk_cap=512, tn_cap=512):
        k1, k2, k3 = jax.random.split(key, 3)
        self.in_features = in_features
        self.out_features = out_features
        self.rank = rank
        self.quadratic_decomposed = jax.random.normal(
            k1, (in_features, rank, out_features), dtype)
        self.weight = jax.random.normal(k2, (out_features, in_features), dtype)
        # torch's `nn.Parameter(torch.Tensor(out_features))` is uninitialized;
        # use deterministic random values here.
        self.bias = jax.random.normal(k3, (out_features,), dtype) if bias else None
        # Per-call transpose/pad/concat/cast hoisted here (done once).
        self._params = prepare_convex_quadratic_params(
            self.quadratic_decomposed, self.weight, self.bias,
            compute_dtype=compute_dtype, tk_cap=tk_cap, tn_cap=tn_cap)

    def __call__(self, x):
        return convex_quadratic_apply(self._params, x)


# ---------------------------------------------------------------------------
# Reference (plain JAX) and checks
# ---------------------------------------------------------------------------
def _reference_forward(x, Q, W, b, cast_dtype=None):
    if cast_dtype is not None:   # mirror the kernel's bf16 input quantization
        x = x.astype(cast_dtype).astype(jnp.float32)
        Q = Q.astype(cast_dtype).astype(jnp.float32)
        W = W.astype(cast_dtype).astype(jnp.float32)
    h = jnp.einsum("bk,krn->rbn", x, Q)                  # (rank, B, out)
    quad = jnp.sum(h ** 2, axis=0)                       # (B, out)
    lin = x @ W.T
    if b is not None:
        lin = lin + b.astype(jnp.float32)
    return quad + lin


def _assert_close(y, ref, tol):
    denom = float(jnp.maximum(jnp.max(jnp.abs(ref)), 1.0))
    rel = float(jnp.max(jnp.abs(y.astype(jnp.float32) - ref))) / denom
    assert rel < tol, f"max normalized error {rel} >= {tol}"


if __name__ == "__main__":
    key = jax.random.PRNGKey(0)
    kx1, kx2, kx3, kp1, kp2, kp3 = jax.random.split(key, 6)

    # Case 1: MXU-aligned shapes (no padding path), rank=2.
    layer1 = ConvexQuadratic(128, 128, bias=True, rank=2, key=kp1)
    x1 = jax.random.normal(kx1, (8, 128), dtype=jnp.float32)
    y1 = jax.block_until_ready(layer1(x1))
    ref1_q = _reference_forward(x1, layer1.quadratic_decomposed, layer1.weight,
                                layer1.bias, cast_dtype=jnp.bfloat16)
    ref1_f = _reference_forward(x1, layer1.quadratic_decomposed, layer1.weight,
                                layer1.bias)
    assert y1.shape == (8, 128) and y1.dtype == x1.dtype
    _assert_close(y1, ref1_q, 2e-2)     # vs bf16-quantized reference (tight)
    _assert_close(y1, ref1_f, 1e-1)     # sanity vs full f32 reference (loose)

    # Case 2: non-aligned shapes exercise the zero-padding path, rank=1.
    layer2 = ConvexQuadratic(32, 16, bias=True, rank=1, key=kp2)
    x2 = jax.random.normal(kx2, (6, 32), dtype=jnp.float32)
    y2 = jax.block_until_ready(layer2(x2))
    ref2_q = _reference_forward(x2, layer2.quadratic_decomposed, layer2.weight,
                                layer2.bias, cast_dtype=jnp.bfloat16)
    assert y2.shape == (6, 16) and y2.dtype == x2.dtype
    _assert_close(y2, ref2_q, 2e-2)

    # Case 3: small tile caps force a multi-step (2, 2, 3) grid — exercises the
    # K-accumulation init/epilogue gating and the N-tile-interleaved fused RHS.
    layer3 = ConvexQuadratic(300, 200, bias=True, rank=3, key=kp3,
                             tk_cap=128, tn_cap=128)
    layer3._params["tm_cap"] = 16
    x3 = jax.random.normal(kx3, (20, 300), dtype=jnp.float32)
    y3 = jax.block_until_ready(layer3(x3))
    ref3_q = _reference_forward(x3, layer3.quadratic_decomposed, layer3.weight,
                                layer3.bias, cast_dtype=jnp.bfloat16)
    assert y3.shape == (20, 200) and y3.dtype == x3.dtype
    _assert_close(y3, ref3_q, 2e-2)

    print("KERNEL_OK")
</pallas_src>

<mosaic_0001>
module attributes {stable_mosaic.version = 11 : i64} {
  func.func @_convex_quadratic_kernel(%arg0: i32, %arg1: i32, %arg2: i32, %arg3: memref<8x128xbf16, #tpu.memory_space<vmem>>, %arg4: memref<128x384xbf16, #tpu.memory_space<vmem>>, %arg5: memref<1x128xf32, #tpu.memory_space<vmem>>, %arg6: memref<8x128xf32, #tpu.memory_space<vmem>>, %arg7: memref<8x384xf32, #tpu.memory_space<vmem>>) attributes {dimension_semantics = [#tpu.dimension_semantics<parallel>, #tpu.dimension_semantics<parallel>, #tpu.dimension_semantics<arbitrary>], iteration_bounds = array<i64: 1, 1, 1>, scalar_prefetch = 0 : i64, scratch_operands = 1 : i64, tpu.core_type = #tpu.core_type<tc>, window_params = [{transform_indices = @transform_0, window_bounds = array<i64: 8, 128>}, {transform_indices = @transform_1, window_bounds = array<i64: 128, 384>}, {transform_indices = @transform_2, window_bounds = array<i64: 1, 128>}, {transform_indices = @transform_3, window_bounds = array<i64: 8, 128>}]} {
    %c0_i32 = arith.constant 0 : i32
    %0 = arith.cmpi eq, %arg2, %c0_i32 : i32
    %1 = arith.extui %0 : i1 to i32
    %c0_i32_0 = arith.constant 0 : i32
    %2 = arith.cmpi ne, %1, %c0_i32_0 : i32
    scf.if %2 {
      %cst_10 = arith.constant 0.000000e+00 : f32
      %12 = vector.broadcast %cst_10 : f32 to vector<8x384xf32>
      %c0_11 = arith.constant 0 : index
      %c0_12 = arith.constant 0 : index
      %13 = vector.load %arg7[%c0_11, %c0_12] : memref<8x384xf32, #tpu.memory_space<vmem>>, vector<8x384xf32>
      tpu.vector_store %arg7[%c0_11, %c0_12], %12 {strides = array<i32>} : memref<8x384xf32, #tpu.memory_space<vmem>>, vector<8x384xf32>,
    } else {
    }
    %c0 = arith.constant 0 : index
    %c0_1 = arith.constant 0 : index
    %3 = vector.load %arg7[%c0, %c0_1] : memref<8x384xf32, #tpu.memory_space<vmem>>, vector<8x384xf32>
    %c0_2 = arith.constant 0 : index
    %c0_3 = arith.constant 0 : index
    %4 = vector.load %arg3[%c0_2, %c0_3] : memref<8x128xbf16, #tpu.memory_space<vmem>>, vector<8x128xbf16>
    %c0_4 = arith.constant 0 : index
    %c0_5 = arith.constant 0 : index
    %5 = vector.load %arg4[%c0_4, %c0_5] : memref<128x384xbf16, #tpu.memory_space<vmem>>, vector<128x384xbf16>
    %cst = arith.constant dense<0.000000e+00> : vector<8x384xf32>
    %6 = tpu.matmul %4, %5, %cst {dimension_numbers = #tpu.dot_dimension_numbers<[1], [0], [0], [1], [0, 0, 1, 1], [], []>} : vector<8x128xbf16>, vector<128x384xbf16>, vector<8x384xf32> -> vector<8x384xf32>
    %7 = arith.addf %3, %6 : vector<8x384xf32>
    %c0_6 = arith.constant 0 : index
    %c0_7 = arith.constant 0 : index
    %8 = vector.load %arg7[%c0_6, %c0_7] : memref<8x384xf32, #tpu.memory_space<vmem>>, vector<8x384xf32>
    tpu.vector_store %arg7[%c0_6, %c0_7], %7 {strides = array<i32>} : memref<8x384xf32, #tpu.memory_space<vmem>>, vector<8x384xf32>,
    %c0_i32_8 = arith.constant 0 : i32
    %9 = arith.cmpi eq, %arg2, %c0_i32_8 : i32
    %10 = arith.extui %9 : i1 to i32
    %c0_i32_9 = arith.constant 0 : i32
    %11 = arith.cmpi ne, %10, %c0_i32_9 : i32
    scf.if %11 {
      %c0_10 = arith.constant 0 : index
      %c0_11 = arith.constant 0 : index
      %12 = vector.load %arg7[%c0_10, %c0_11] : memref<8x384xf32, #tpu.memory_space<vmem>>, vector<8x128xf32>
      %c0_12 = arith.constant 0 : index
      %c0_13 = arith.constant 0 : index
      %13 = vector.load %arg5[%c0_12, %c0_13] : memref<1x128xf32, #tpu.memory_space<vmem>>, vector<1x128xf32>
      %14 = vector.broadcast %13 : vector<1x128xf32> to vector<8x128xf32>
      %15 = arith.addf %12, %14 : vector<8x128xf32>
      %c0_14 = arith.constant 0 : index
      %c128 = arith.constant 128 : index
      %16 = vector.load %arg7[%c0_14, %c128] : memref<8x384xf32, #tpu.memory_space<vmem>>, vector<8x128xf32>
      %17 = arith.mulf %16, %16 : vector<8x128xf32>
      %18 = arith.addf %15, %17 : vector<8x128xf32>
      %c0_15 = arith.constant 0 : index
      %c256 = arith.constant 256 : index
      %19 = vector.load %arg7[%c0_15, %c256] : memref<8x384xf32, #tpu.memory_space<vmem>>, vector<8x128xf32>
      %20 = arith.mulf %19, %19 : vector<8x128xf32>
      %21 = arith.addf %18, %20 : vector<8x128xf32>
      %c0_16 = arith.constant 0 : index
      %c0_17 = arith.constant 0 : index
      %22 = vector.load %arg6[%c0_16, %c0_17] : memref<8x128xf32, #tpu.memory_space<vmem>>, vector<8x128xf32>
      tpu.vector_store %arg6[%c0_16, %c0_17], %21 {strides = array<i32>} : memref<8x128xf32, #tpu.memory_space<vmem>>, vector<8x128xf32>,
    } else {
    }
    return
  }
  func.func @transform_0(%arg0: i32, %arg1: i32, %arg2: i32) -> (i32, i32) {
    %c0_i32 = arith.constant 0 : i32
    return %arg0, %arg2 : i32, i32
  }
  func.func @transform_1(%arg0: i32, %arg1: i32, %arg2: i32) -> (i32, i32) {
    %c0_i32 = arith.constant 0 : i32
    return %arg2, %arg1 : i32, i32
  }
  func.func @transform_2(%arg0: i32, %arg1: i32, %arg2: i32) -> (i32, i32) {
    %c0_i32 = arith.constant 0 : i32
    %c0_i32_0 = arith.constant 0 : i32
    return %c0_i32, %arg1 : i32, i32
  }
  func.func @transform_3(%arg0: i32, %arg1: i32, %arg2: i32) -> (i32, i32) {
    %c0_i32 = arith.constant 0 : i32
    return %arg0, %arg1 : i32, i32
  }
}

</mosaic_0001>

<llo_original>
// kernel: tpu_custom_call.1
$region0: #{tpu_custom_call.1}
  #allocation0 [shape = 'u32[]', space=smem, size = 0x4, offset = 0x4, fixed_abs, tag = 'smem constant byte address 0x4 - core index']
  #allocation1 [shape = 'u32[144,128]{1,0:T(1,128)}', space=vmem, size = 0x12000, scoped, tag = 'internal scratch']
  #allocation2 [shape = 'f32[8,384]{1,0:T(8,128)}', space=vmem, size = 0x3000, scoped, tag = 'scratch operand']
  %s0 = inlined_call_operand.hbm [shape: bf16[8,128], index: 0, kind: input, shape index: {}]
  %s1 = inlined_call_operand.hbm [shape: bf16[128,384], index: 1, kind: input, shape index: {}]
  %s2 = inlined_call_operand.vmem [shape: f32[1,128], index: 2, kind: input, shape index: {}]
  %s3 = inlined_call_operand.hbm [shape: f32[8,128], index: 3, kind: output, shape index: {}]
  %s4 = sld [smem:[#allocation0]]
  $region38: #{tpu_custom_call.1} parent=0
    _
  %s6 = ssub.s32 1, %s4
  %s7 = scalar_select 0, %s6, %s4
  $region1: #{tpu_custom_call.1} parent=0
    #allocation3 [shape = 'u8[2048]{0}', space=vmem, size = 0x800, scoped, tag = 'input window, operand 0, single buffered']
    #allocation4 [shape = 's32[1]{0}', space=sflag, size = 0x4, scoped, tag = 'scoped memory for tpu_custom_call.1']
    #allocation5 [shape = 's32[1]{0}', space=sflag, size = 0x4, scoped, tag = 'scoped memory for tpu_custom_call.1']
    #allocation6 [shape = 'u8[98304]{0}', space=vmem, size = 0x18000, scoped, tag = 'input window, operand 1, single buffered']
    #allocation7 [shape = 's32[1]{0}', space=sflag, size = 0x4, scoped, tag = 'scoped memory for tpu_custom_call.1']
    #allocation8 [shape = 'u8[4096]{0}', space=vmem, size = 0x1000, scoped, tag = 'output window, operand 0, single buffered']
    %8 = vsyncpa [#allocation4], 0
    %9 = vsyncpa [#allocation7], 0
    %10 = vsyncpa [#allocation5], 0
    // Predicated region
    $region2: #{tpu_custom_call.1} parent=1 // pred_check
      _
    $region3: #{tpu_custom_call.1} parent=1 // pred_check_branch
      %12 = sbr.rel (0) target = $region5
    $region4: #{tpu_custom_call.1} parent=1 // pred_region
      %s14 = ssub.s32 64, 64
      %15 = vsyncadd [#allocation4], %s14
      %s17 = sshll.u32 [#allocation3], 4
      %s18 = int_to_ptr.vmem [resolvable:$true] %s17
      %20 = dma.hbm_to_vmem [thread:$0]  %s0, 64, %s18, [#allocation4]
    $region5: #{tpu_custom_call.1} parent=1 // pred_fallthru
      _
    // Predicated region
    $region6: #{tpu_custom_call.1} parent=1 // pred_check
      _
    $region7: #{tpu_custom_call.1} parent=1 // pred_check_branch
      %22 = sbr.rel (0) target = $region9
    $region8: #{tpu_custom_call.1} parent=1 // pred_region
      %s24 = ssub.s32 3072, 3072
      %25 = vsyncadd [#allocation7], %s24
      %s26 = sshll.u32 [#allocation6], 4
      %s27 = int_to_ptr.vmem [resolvable:$true] %s26
      %32 = dma.hbm_to_vmem [thread:$0]  %s1, 3072, %s27, [#allocation7], 192, 192, 12
    $region9: #{tpu_custom_call.1} parent=1 // pred_fallthru
      _
    // Predicated region
    $region10: #{tpu_custom_call.1} parent=1 // pred_check
      _
    $region11: #{tpu_custom_call.1} parent=1 // pred_check_branch
      %34 = sbr.rel (0) target = $region13
    $region12: #{tpu_custom_call.1} parent=1 // pred_region
      _
    $region13: #{tpu_custom_call.1} parent=1 // pred_fallthru
      _
    // Predicated region
    $region14: #{tpu_custom_call.1} parent=1 // pred_check
      _
    $region15: #{tpu_custom_call.1} parent=1 // pred_check_branch
      %36 = sbr.rel (0) target = $region17
    $region16: #{tpu_custom_call.1} parent=1 // pred_region
      %37 = dma.done [#allocation4], 64
    $region17: #{tpu_custom_call.1} parent=1 // pred_fallthru
      _
    // Predicated region
    $region18: #{tpu_custom_call.1} parent=1 // pred_check
      _
    $region19: #{tpu_custom_call.1} parent=1 // pred_check_branch
      %39 = sbr.rel (0) target = $region21
    $region20: #{tpu_custom_call.1} parent=1 // pred_region
      %40 = dma.done [#allocation7], 3072
    $region21: #{tpu_custom_call.1} parent=1 // pred_fallthru
      _
    %p42 = scmp.eq.s32.totalorder 0, 0
    // Predicated region
    $region22: #{tpu_custom_call.1} parent=1 // pred_check
      %p43 = pneg %p42
    $region23: #{tpu_custom_call.1} parent=1 // pred_check_branch
      %45 = sbr.rel (%p43) target = $region25
    $region24: #{tpu_custom_call.1} parent=1 // pred_region
      %46 = vst [vmem:[#allocation2] sm:$0xff] 0.0
      %47 = vst [vmem:[#allocation2 + $0x8] sm:$0xff] 0.0
      %48 = vst [vmem:[#allocation2 + $0x10] sm:$0xff] 0.0
    $region25: #{tpu_custom_call.1} parent=1 // pred_fallthru
      _
    %v49 = vld [vmem:[#allocation2] sm:$0xff]
    %v50 = vld [vmem:[#allocation2 + $0x8] sm:$0xff]
    %v51 = vld [vmem:[#allocation2 + $0x10] sm:$0xff]
    %v52 = vld [vmem:[#allocation3] sm:$0xf]
    %v53 = vld [vmem:[#allocation6] sm:$0xff]
    %v54 = vld [vmem:[#allocation6 + $0x8] sm:$0xf]
    %v55 = vld [vmem:[#allocation6 + $0xc] sm:$0xff]
    %v56 = vld [vmem:[#allocation6 + $0x14] sm:$0xf]
    %v57 = vld [vmem:[#allocation6 + $0x18] sm:$0xff]
    %v58 = vld [vmem:[#allocation6 + $0x20] sm:$0xf]
    %v59 = vld [vmem:[#allocation6 + $0x24] sm:$0xff]
    %v60 = vld [vmem:[#allocation6 + $0x2c] sm:$0xf]
    %v61 = vld [vmem:[#allocation6 + $0x30] sm:$0xff]
    %v62 = vld [vmem:[#allocation6 + $0x38] sm:$0xf]
    %v63 = vld [vmem:[#allocation6 + $0x3c] sm:$0xff]
    %v64 = vld [vmem:[#allocation6 + $0x44] sm:$0xf]
    %v65 = vld [vmem:[#allocation6 + $0x48] sm:$0xff]
    %v66 = vld [vmem:[#allocation6 + $0x50] sm:$0xf]
    %v67 = vld [vmem:[#allocation6 + $0x54] sm:$0xff]
    %v68 = vld [vmem:[#allocation6 + $0x5c] sm:$0xf]
    %v69 = vld [vmem:[#allocation6 + $0x60] sm:$0xff]
    %v70 = vld [vmem:[#allocation6 + $0x68] sm:$0xf]
    %v71 = vld [vmem:[#allocation6 + $0x6c] sm:$0xff]
    %v72 = vld [vmem:[#allocation6 + $0x74] sm:$0xf]
    %v73 = vld [vmem:[#allocation6 + $0x78] sm:$0xff]
    %v74 = vld [vmem:[#allocation6 + $0x80] sm:$0xf]
    %v75 = vld [vmem:[#allocation6 + $0x84] sm:$0xff]
    %v76 = vld [vmem:[#allocation6 + $0x8c] sm:$0xf]
    %v77 = vld [vmem:[#allocation6 + $0x90] sm:$0xff]
    %v78 = vld [vmem:[#allocation6 + $0x98] sm:$0xf]
    %v79 = vld [vmem:[#allocation6 + $0x9c] sm:$0xff]
    %v80 = vld [vmem:[#allocation6 + $0xa4] sm:$0xf]
    %v81 = vld [vmem:[#allocation6 + $0xa8] sm:$0xff]
    %v82 = vld [vmem:[#allocation6 + $0xb0] sm:$0xf]
    %v83 = vld [vmem:[#allocation6 + $0xb4] sm:$0xff]
    %v84 = vld [vmem:[#allocation6 + $0xbc] sm:$0xf]
    %v117 = vunpack.c.l.b16 %v53
    %v118 = vunpack.c.h.b16 %v53
    %v119 = vunpack.c.l.b16 %v54
    %v120 = vunpack.c.l.b16 %v55
    %v121 = vunpack.c.h.b16 %v55
    %v122 = vunpack.c.l.b16 %v56
    %v123 = vunpack.c.l.b16 %v57
    %v124 = vunpack.c.h.b16 %v57
    %v125 = vunpack.c.l.b16 %v58
    %v126 = vunpack.c.l.b16 %v59
    %v127 = vunpack.c.h.b16 %v59
    %v128 = vunpack.c.l.b16 %v60
    %v129 = vunpack.c.l.b16 %v61
    %v130 = vunpack.c.h.b16 %v61
    %v131 = vunpack.c.l.b16 %v62
    %v132 = vunpack.c.l.b16 %v63
    %v133 = vunpack.c.h.b16 %v63
    %v134 = vunpack.c.l.b16 %v64
    %v135 = vunpack.c.l.b16 %v65
    %v136 = vunpack.c.h.b16 %v65
    %v137 = vunpack.c.l.b16 %v66
    %v138 = vunpack.c.l.b16 %v67
    %v139 = vunpack.c.h.b16 %v67
    %v140 = vunpack.c.l.b16 %v68
    %v141 = vunpack.c.l.b16 %v69
    %v142 = vunpack.c.h.b16 %v69
    %v143 = vunpack.c.l.b16 %v70
    %v144 = vunpack.c.l.b16 %v71
    %v145 = vunpack.c.h.b16 %v71
    %v146 = vunpack.c.l.b16 %v72
    %v147 = vunpack.c.l.b16 %v73
    %v148 = vunpack.c.h.b16 %v73
    %v149 = vunpack.c.l.b16 %v74
    %v150 = vunpack.c.l.b16 %v75
    %v151 = vunpack.c.h.b16 %v75
    %v152 = vunpack.c.l.b16 %v76
    %v153 = vunpack.c.l.b16 %v77
    %v154 = vunpack.c.h.b16 %v77
    %v155 = vunpack.c.l.b16 %v78
    %v156 = vunpack.c.l.b16 %v79
    %v157 = vunpack.c.h.b16 %v79
    %v158 = vunpack.c.l.b16 %v80
    %v159 = vunpack.c.l.b16 %v81
    %v160 = vunpack.c.h.b16 %v81
    %v161 = vunpack.c.l.b16 %v82
    %v162 = vunpack.c.l.b16 %v83
    %v163 = vunpack.c.h.b16 %v83
    %v164 = vunpack.c.l.b16 %v84
    %v165 = vpack.c.b16 %v120, %v117
    %v166 = vpack.c.b16 %v121, %v118
    %v167 = vpack.c.b16 %v122, %v119
    %v168 = vpack.c.b16 %v126, %v123
    %v169 = vpack.c.b16 %v127, %v124
    %v170 = vpack.c.b16 %v128, %v125
    %v171 = vpack.c.b16 %v132, %v129
    %v172 = vpack.c.b16 %v133, %v130
    %v173 = vpack.c.b16 %v134, %v131
    %v174 = vpack.c.b16 %v138, %v135
    %v175 = vpack.c.b16 %v139, %v136
    %v176 = vpack.c.b16 %v140, %v137
    %v177 = vpack.c.b16 %v144, %v141
    %v178 = vpack.c.b16 %v145, %v142
    %v179 = vpack.c.b16 %v146, %v143
    %v180 = vpack.c.b16 %v150, %v147
    %v181 = vpack.c.b16 %v151, %v148
    %v182 = vpack.c.b16 %v152, %v149
    %v183 = vpack.c.b16 %v156, %v153
    %v184 = vpack.c.b16 %v157, %v154
    %v185 = vpack.c.b16 %v158, %v155
    %v186 = vpack.c.b16 %v162, %v159
    %v187 = vpack.c.b16 %v163, %v160
    %v188 = vpack.c.b16 %v164, %v161
    %213 = vmatprep.subr.bf16.mxu0 %v166
    %214 = vmatpush1.bf16.msra.mxu0 %v165
    %215 = vmatprep.subr.bf16.mxu0 %v169
    %216 = vmatpush1.bf16.msra.mxu0 %v168
    %217 = vmatprep.subr.bf16.mxu0 %v172
    %218 = vmatpush1.bf16.msra.mxu0 %v171
    %219 = vmatprep.subr.bf16.mxu0 %v175
    %220 = vmatpush1.bf16.msra.mxu0 %v174
    %221 = vmatprep.subr.bf16.mxu0 %v178
    %222 = vmatpush1.bf16.msra.mxu0 %v177
    %223 = vmatprep.subr.bf16.mxu0 %v181
    %224 = vmatpush1.bf16.msra.mxu0 %v180
    %225 = vmatprep.subr.bf16.mxu0 %v184
    %226 = vmatpush1.bf16.msra.mxu0 %v183
    %227 = vmatprep.subr.bf16.mxu0 %v187
    %228 = vmatpush1.bf16.msra.mxu0 %v186
    %229 = vmatprep.subr.bf16.mxu0 0
    %230 = vmatpush1.bf16.msra.mxu0 0
    %231 = vmatprep.subr.bf16.mxu0 0
    %232 = vmatpush1.bf16.msra.mxu0 0
    %233 = vmatprep.subr.bf16.mxu0 0
    %234 = vmatpush1.bf16.msra.mxu0 0
    %235 = vmatprep.subr.bf16.mxu0 0
    %236 = vmatpush1.bf16.msra.mxu0 0
    %237 = vmatprep.subr.bf16.mxu0 0
    %238 = vmatpush1.bf16.msra.mxu0 0
    %239 = vmatprep.subr.bf16.mxu0 0
    %240 = vmatpush1.bf16.msra.mxu0 0
    %241 = vmatprep.subr.bf16.mxu0 0
    %242 = vmatpush1.bf16.msra.mxu0 0
    %243 = vmatprep.subr.bf16.mxu0 0
    %244 = vmatpush1.bf16.msra.mxu0 0
    %245 = vmatprep.mubr.bf16.mxu0 0
    %246 = vmatmul.mubr.bf16.gmra.mrb[0].mxu0 %v52
    %v247 = vpop.f32.mrb[0].mxu0
    %v248 = vadd.f32 0.0, %v247
    %v249 = vpop.f32.mrb[0].mxu0
    %v250 = vadd.f32 0.0, %v249
    %v251 = vpop.f32.mrb[0].mxu0
    %v252 = vpop.f32.mrb[0].mxu0
    %253 = vdwg.mxu0
    %254 = vmatprep.subr.bf16.mxu0 0
    %255 = vmatpush1.bf16.msra.mxu0 %v167
    %256 = vmatprep.subr.bf16.mxu0 0
    %257 = vmatpush1.bf16.msra.mxu0 %v170
    %258 = vmatprep.subr.bf16.mxu0 0
    %259 = vmatpush1.bf16.msra.mxu0 %v173
    %260 = vmatprep.subr.bf16.mxu0 0
    %261 = vmatpush1.bf16.msra.mxu0 %v176
    %262 = vmatprep.subr.bf16.mxu0 0
    %263 = vmatpush1.bf16.msra.mxu0 %v179
    %264 = vmatprep.subr.bf16.mxu0 0
    %265 = vmatpush1.bf16.msra.mxu0 %v182
    %266 = vmatprep.subr.bf16.mxu0 0
    %267 = vmatpush1.bf16.msra.mxu0 %v185
    %268 = vmatprep.subr.bf16.mxu0 0
    %269 = vmatpush1.bf16.msra.mxu0 %v188
    %270 = vmatprep.subr.bf16.mxu0 0
    %271 = vmatpush1.bf16.msra.mxu0 0
    %272 = vmatprep.subr.bf16.mxu0 0
    %273 = vmatpush1.bf16.msra.mxu0 0
    %274 = vmatprep.subr.bf16.mxu0 0
    %275 = vmatpush1.bf16.msra.mxu0 0
    %276 = vmatprep.subr.bf16.mxu0 0
    %277 = vmatpush1.bf16.msra.mxu0 0
    %278 = vmatprep.subr.bf16.mxu0 0
    %279 = vmatpush1.bf16.msra.mxu0 0
    %280 = vmatprep.subr.bf16.mxu0 0
    %281 = vmatpush1.bf16.msra.mxu0 0
    %282 = vmatprep.subr.bf16.mxu0 0
    %283 = vmatpush1.bf16.msra.mxu0 0
    %284 = vmatprep.subr.bf16.mxu0 0
    %285 = vmatpush1.bf16.msra.mxu0 0
    %286 = vmatprep.mubr.bf16.mxu0 0
    %287 = vmatmul.mubr.bf16.gmra.mrb[0].mxu0 %v52
    %v288 = vpop.f32.mrb[0].mxu0
    %v289 = vadd.f32 0.0, %v288
    %v290 = vpop.f32.mrb[0].mxu0
    %v291 = vpop.f32.mrb[0].mxu0
    %v292 = vpop.f32.mrb[0].mxu0
    %293 = vdwg.mxu0
    %v294 = vadd.f32 %v49, %v248
    %v295 = vadd.f32 %v50, %v250
    %v296 = vadd.f32 %v51, %v289
    %297 = vst [vmem:[#allocation2] sm:$0xff] %v294
    %298 = vst [vmem:[#allocation2 + $0x8] sm:$0xff] %v295
    %299 = vst [vmem:[#allocation2 + $0x10] sm:$0xff] %v296
    // Predicated region
    $region26: #{tpu_custom_call.1} parent=1 // pred_check
      %p300 = pneg %p42
    $region27: #{tpu_custom_call.1} parent=1 // pred_check_branch
      %302 = sbr.rel (%p300) target = $region29
    $region28: #{tpu_custom_call.1} parent=1 // pred_region
      %v303 = vld [vmem:[#allocation2] sm:$0xff]
      %v304 = vld [vmem:[%s2] sm:$0x1]
      %v306 = vlaneseq
      %v307 = vshrl.u32 %v306, 7
      %v308 = vsub.s32 0, %v307
      %v309 = vrot.slane %v304, %v308
      %v311 = vadd.f32 %v303, %v309
      %v312 = vld [vmem:[#allocation2 + $0x8] sm:$0xff]
      %v313 = vmul.f32 %v312, %v312
      %v314 = vadd.f32 %v311, %v313
      %v315 = vld [vmem:[#allocation2 + $0x10] sm:$0xff]
      %v316 = vmul.f32 %v315, %v315
      %v317 = vadd.f32 %v314, %v316
      %318 = vst [vmem:[#allocation8] sm:$0xff] %v317
    $region29: #{tpu_custom_call.1} parent=1 // pred_fallthru
      _
    // Predicated region
    $region30: #{tpu_custom_call.1} parent=1 // pred_check
      _
    $region31: #{tpu_custom_call.1} parent=1 // pred_check_branch
      %320 = sbr.rel (0) target = $region33
    $region32: #{tpu_custom_call.1} parent=1 // pred_region
      %s322 = ssub.s32 128, 128
      %323 = vsyncadd [#allocation5], %s322
      %s325 = sshll.u32 [#allocation8], 4
      %s326 = int_to_ptr.vmem [resolvable:$true] %s325
      %328 = dma.vmem_to_hbm [thread:$0]  %s326, 128, %s3, [#allocation5]
    $region33: #{tpu_custom_call.1} parent=1 // pred_fallthru
      _
    // Predicated region
    $region34: #{tpu_custom_call.1} parent=1 // pred_check
      _
    $region35: #{tpu_custom_call.1} parent=1 // pred_check_branch
      %330 = sbr.rel (0) target = $region37
    $region36: #{tpu_custom_call.1} parent=1 // pred_region
      %331 = dma.done [#allocation5], 128
    $region37: #{tpu_custom_call.1} parent=1 // pred_fallthru
      _
    %332 = vsyncpa [#allocation4], 1
    %333 = vsyncpa [#allocation7], 1
    %334 = vsyncpa [#allocation5], 1

</llo_original>
